<compile_context>
chip_gen: v5e
topology: v5e:2x2
jax: 0.10.0
libtpu: 0.0.40
codegen_flags: <defaults>
</compile_context>

<pallas_src>
import functools

import jax
import jax.numpy as jnp
from jax.experimental import pallas as pl
from jax.experimental.pallas import tpu as pltpu


def _round_up(x, m):
    return ((x + m - 1) // m) * m


def _classify_kernel(x_ref, w_ref, b_ref, o_ref, acc_ref, *,
                     inv_hw, hw, s_tile, mask_spatial):
    """One (batch-tile, spatial-tile) step of global-avg-pool + 1x1 conv.

    x_ref:   (n_tile, C1, s_tile)     activation tile, native layout, spatial on lanes
    w_ref:   (C1, C2p)                1x1-conv weight (native dtype), grid-invariant
    b_ref:   (1, C2p) f32             bias, grid-invariant
    o_ref:   (n_tile, C2p)            output tile (written on last spatial step)
    acc_ref: (n_tile, C1, aw) f32     per-lane running spatial-sum accumulator
    """
    j = pl.program_id(1)

    @pl.when(j == 0)
    def _():
        acc_ref[...] = jnp.zeros_like(acc_ref)

    x = x_ref[...].astype(jnp.float32)                       # (n_tile, C1, s_tile)
    if mask_spatial:
        # Zero the ragged spatial tail in-register instead of padding x in HBM.
        pos = jax.lax.broadcasted_iota(jnp.int32, x.shape, 2) + j * s_tile
        x = jnp.where(pos < hw, x, 0.0)

    # Deferred lane reduce: fold s_tile lanes down to `aw` per-lane partial sums
    # with pure VPU adds; the aw -> 1 cross-lane reduce happens once at the end.
    aw = acc_ref.shape[-1]
    partial = x[:, :, 0:aw]
    for c in range(1, s_tile // aw):
        partial = partial + x[:, :, c * aw:(c + 1) * aw]
    acc_ref[...] += partial

    @pl.when(j == pl.num_programs(1) - 1)
    def _():
        pooled = jnp.sum(acc_ref[...], axis=-1) * inv_hw     # (n_tile, C1), XLU once
        w = w_ref[...]
        lhs = pooled if w.dtype == jnp.float32 else pooled.astype(w.dtype)
        out = jnp.dot(lhs, w, preferred_element_type=jnp.float32)   # MXU
        o_ref[...] = (out + b_ref[...]).astype(o_ref.dtype)


def classify_forward(x_nchw, weight, bias, *, x_tile_budget_bytes=8 << 20):
    """Classify head: AdaptiveAvgPool2d(1) -> Conv2d(c1, c2, 1) -> Flatten.

    x_nchw: (N, C1, H, W); weight: (C2, C1, 1, 1); bias: (C2,).  Returns (N, C2) f32.
    """
    N, C1, H, W = x_nchw.shape
    C2 = weight.shape[0]
    HW = H * W

    # Native layout: a pure reshape, no HBM transpose / pad pass over x.
    x = x_nchw.reshape(N, C1, HW)
    itemsize = jnp.dtype(x.dtype).itemsize

    # ---- batch tile ------------------------------------------------------
    if N <= 8:
        n_tile = N                                  # single (full-dim) batch block
    else:
        n_tile = max(8, min(32, (N // 8) * 8))
        # keep the f32 per-lane accumulator (n_tile*C1*128*4) modest
        while n_tile > 8 and n_tile * C1 * 128 * 4 > (8 << 20):
            n_tile -= 8

    # ---- spatial (lane-axis) tile -----------------------------------------
    if HW % 128 == 0:
        lane_budget = x_tile_budget_bytes // max(1, n_tile * C1 * itemsize)
        s_tile = int(min(HW, max(128, (lane_budget // 128) * 128)))
        aw = 128
    else:
        # HW not a multiple of 128 (e.g. 7x7=49, 14x14=196): single full-extent
        # lane-dim block (block dim == array dim), accumulator width == HW.
        s_tile = HW
        aw = HW
        while n_tile > 8 and n_tile * C1 * HW * (2 * itemsize + 4) > 3 * x_tile_budget_bytes:
            n_tile -= 8
    mask_spatial = (HW % s_tile) != 0

    # ---- weight / bias (tiny one-time prep; weight keeps its native dtype) ----
    C2_pad = _round_up(C2, 128)                     # lane-dense, unmasked output stores
    w = weight.reshape(C2, C1).T                    # (C1, C2)
    if C2_pad != C2:
        w = jnp.pad(w, ((0, 0), (0, C2_pad - C2)))
    b = jnp.pad(bias.astype(jnp.float32), (0, C2_pad - C2)).reshape(1, C2_pad)

    grid = (pl.cdiv(N, n_tile), pl.cdiv(HW, s_tile))

    # ---- explicit VMEM sizing (cap at 48 MiB so it also fits v7x's 64 MiB) ----
    x_tile_bytes = n_tile * C1 * s_tile * itemsize
    w_bytes = C1 * C2_pad * jnp.dtype(w.dtype).itemsize
    acc_bytes = n_tile * C1 * aw * 4
    out_bytes = n_tile * C2_pad * 4
    need = 2 * x_tile_bytes + w_bytes + C2_pad * 4 + acc_bytes + 2 * out_bytes
    vmem_limit = int(min(max(need + (need >> 2) + (1 << 20), 8 << 20), 48 << 20))

    bytes_accessed = int(N * C1 * HW * itemsize + w_bytes + C2_pad * 4 + N * C2_pad * 4)
    flops = int(N * C1 * HW + 2 * N * C1 * C2_pad)

    out_full = pl.pallas_call(
        functools.partial(_classify_kernel, inv_hw=float(1.0 / HW), hw=HW,
                          s_tile=s_tile, mask_spatial=mask_spatial),
        out_shape=jax.ShapeDtypeStruct((N, C2_pad), jnp.float32),
        grid_spec=pltpu.PrefetchScalarGridSpec(
            num_scalar_prefetch=0,
            grid=grid,
            in_specs=[
                # activation: native NCHW(-flattened) layout, spatial on lanes
                pl.BlockSpec((n_tile, C1, s_tile), lambda i, j: (i, 0, j)),
                # weight / bias: grid-invariant, single-buffered residents
                pl.BlockSpec((C1, C2_pad), lambda i, j: (0, 0),
                             pipeline_mode=pl.Buffered(1)),
                pl.BlockSpec((1, C2_pad), lambda i, j: (0, 0),
                             pipeline_mode=pl.Buffered(1)),
            ],
            out_specs=pl.BlockSpec((n_tile, C2_pad), lambda i, j: (i, 0)),
            scratch_shapes=[pltpu.VMEM((n_tile, C1, aw), jnp.float32)],
        ),
        compiler_params=pltpu.CompilerParams(
            dimension_semantics=("parallel", "arbitrary"),
            vmem_limit_bytes=vmem_limit,
        ),
        cost_estimate=pl.CostEstimate(
            flops=flops, transcendentals=0, bytes_accessed=bytes_accessed),
    )(x, w, b)

    return out_full[:, :C2]


if __name__ == "__main__":
    # Small shapes consistent with the module: N=2, C1=4, H=W=16, C2=8
    key = jax.random.PRNGKey(0)
    kx, kw, kb = jax.random.split(key, 3)

    N, C1, H, W, C2 = 2, 4, 16, 16, 8
    x = jax.random.normal(kx, (N, C1, H, W), dtype=jnp.float32)
    # Deterministic synthetic Conv2d(C1, C2, k=1) parameters.
    weight = jax.random.normal(kw, (C2, C1, 1, 1), dtype=jnp.float32) * 0.1
    bias = jax.random.normal(kb, (C2,), dtype=jnp.float32) * 0.1

    out = classify_forward(x, weight, bias)
    out = jax.block_until_ready(out)

    # Pure-JAX reference check (global avg pool + 1x1 conv + flatten).
    pooled_ref = jnp.mean(x, axis=(2, 3))                        # (N, C1)
    out_ref = pooled_ref @ weight.reshape(C2, C1).T + bias       # (N, C2)
    assert out.shape == (N, C2)
    assert jnp.allclose(out, out_ref, atol=1e-5, rtol=1e-5), float(
        jnp.max(jnp.abs(out - out_ref)))

    print("KERNEL_OK")
</pallas_src>

<mosaic_0001>
module attributes {stable_mosaic.version = 11 : i64} {
  func.func @_classify_kernel(%arg0: i32, %arg1: i32, %arg2: memref<2x4x256xf32, #tpu.memory_space<vmem>>, %arg3: memref<4x128xf32, #tpu.memory_space<vmem>>, %arg4: memref<1x128xf32, #tpu.memory_space<vmem>>, %arg5: memref<2x128xf32, #tpu.memory_space<vmem>>, %arg6: memref<2x4x128xf32, #tpu.memory_space<vmem>>) attributes {dimension_semantics = [#tpu.dimension_semantics<parallel>, #tpu.dimension_semantics<arbitrary>], iteration_bounds = array<i64: 1, 1>, scalar_prefetch = 0 : i64, scratch_operands = 1 : i64, tpu.core_type = #tpu.core_type<tc>, window_params = [{transform_indices = @transform_0, window_bounds = array<i64: 2, 4, 256>}, {pipeline_mode = #tpu.pipeline_mode<synchronous>, transform_indices = @transform_1, window_bounds = array<i64: 4, 128>}, {pipeline_mode = #tpu.pipeline_mode<synchronous>, transform_indices = @transform_2, window_bounds = array<i64: 1, 128>}, {transform_indices = @transform_3, window_bounds = array<i64: 2, 128>}]} {
    %c0_i32 = arith.constant 0 : i32
    %0 = arith.cmpi eq, %arg1, %c0_i32 : i32
    %1 = arith.extui %0 : i1 to i32
    %c0_i32_0 = arith.constant 0 : i32
    %2 = arith.cmpi ne, %1, %c0_i32_0 : i32
    scf.if %2 {
      %cst = arith.constant 0.000000e+00 : f32
      %13 = vector.broadcast %cst : f32 to vector<2x4x128xf32>
      %c0_11 = arith.constant 0 : index
      %c0_12 = arith.constant 0 : index
      %c0_13 = arith.constant 0 : index
      %14 = vector.load %arg6[%c0_11, %c0_12, %c0_13] : memref<2x4x128xf32, #tpu.memory_space<vmem>>, vector<2x4x128xf32>
      tpu.vector_store %arg6[%c0_11, %c0_12, %c0_13], %13 {strides = array<i32>} : memref<2x4x128xf32, #tpu.memory_space<vmem>>, vector<2x4x128xf32>,
    } else {
    }
    %c0 = arith.constant 0 : index
    %c0_1 = arith.constant 0 : index
    %c0_2 = arith.constant 0 : index
    %3 = vector.load %arg2[%c0, %c0_1, %c0_2] : memref<2x4x256xf32, #tpu.memory_space<vmem>>, vector<2x4x256xf32>
    %4 = vector.extract_strided_slice %3 {offsets = [0, 0, 0], sizes = [2, 4, 128], strides = [1, 1, 1]} : vector<2x4x256xf32> to vector<2x4x128xf32>
    %5 = vector.extract_strided_slice %3 {offsets = [0, 0, 128], sizes = [2, 4, 128], strides = [1, 1, 1]} : vector<2x4x256xf32> to vector<2x4x128xf32>
    %6 = arith.addf %4, %5 : vector<2x4x128xf32>
    %c0_3 = arith.constant 0 : index
    %c0_4 = arith.constant 0 : index
    %c0_5 = arith.constant 0 : index
    %7 = vector.load %arg6[%c0_3, %c0_4, %c0_5] : memref<2x4x128xf32, #tpu.memory_space<vmem>>, vector<2x4x128xf32>
    %8 = arith.addf %7, %6 : vector<2x4x128xf32>
    %c0_6 = arith.constant 0 : index
    %c0_7 = arith.constant 0 : index
    %c0_8 = arith.constant 0 : index
    %9 = vector.load %arg6[%c0_6, %c0_7, %c0_8] : memref<2x4x128xf32, #tpu.memory_space<vmem>>, vector<2x4x128xf32>
    tpu.vector_store %arg6[%c0_6, %c0_7, %c0_8], %8 {strides = array<i32>} : memref<2x4x128xf32, #tpu.memory_space<vmem>>, vector<2x4x128xf32>,
    %c0_i32_9 = arith.constant 0 : i32
    %10 = arith.cmpi eq, %arg1, %c0_i32_9 : i32
    %11 = arith.extui %10 : i1 to i32
    %c0_i32_10 = arith.constant 0 : i32
    %12 = arith.cmpi ne, %11, %c0_i32_10 : i32
    scf.if %12 {
      %c0_11 = arith.constant 0 : index
      %c0_12 = arith.constant 0 : index
      %c0_13 = arith.constant 0 : index
      %13 = vector.load %arg6[%c0_11, %c0_12, %c0_13] : memref<2x4x128xf32, #tpu.memory_space<vmem>>, vector<2x4x128xf32>
      %cst = arith.constant dense<0.000000e+00> : vector<2x4xf32>
      %14 = vector.multi_reduction <add>, %13, %cst [2] : vector<2x4x128xf32> to vector<2x4xf32>
      %cst_14 = arith.constant 3.906250e-03 : f32
      %15 = vector.broadcast %cst_14 : f32 to vector<2x4xf32>
      %16 = arith.mulf %14, %15 : vector<2x4xf32>
      %c0_15 = arith.constant 0 : index
      %c0_16 = arith.constant 0 : index
      %17 = vector.load %arg3[%c0_15, %c0_16] : memref<4x128xf32, #tpu.memory_space<vmem>>, vector<4x128xf32>
      %cst_17 = arith.constant dense<0.000000e+00> : vector<2x128xf32>
      %18 = tpu.matmul %16, %17, %cst_17 {dimension_numbers = #tpu.dot_dimension_numbers<[1], [0], [0], [1], [0, 0, 1, 1], [], []>} : vector<2x4xf32>, vector<4x128xf32>, vector<2x128xf32> -> vector<2x128xf32>
      %c0_18 = arith.constant 0 : index
      %c0_19 = arith.constant 0 : index
      %19 = vector.load %arg4[%c0_18, %c0_19] : memref<1x128xf32, #tpu.memory_space<vmem>>, vector<1x128xf32>
      %20 = vector.broadcast %19 : vector<1x128xf32> to vector<2x128xf32>
      %21 = arith.addf %18, %20 : vector<2x128xf32>
      %c0_20 = arith.constant 0 : index
      %c0_21 = arith.constant 0 : index
      %22 = vector.load %arg5[%c0_20, %c0_21] : memref<2x128xf32, #tpu.memory_space<vmem>>, vector<2x128xf32>
      tpu.vector_store %arg5[%c0_20, %c0_21], %21 {strides = array<i32>} : memref<2x128xf32, #tpu.memory_space<vmem>>, vector<2x128xf32>,
    } else {
    }
    return
  }
  func.func @transform_0(%arg0: i32, %arg1: i32) -> (i32, i32, i32) {
    %c0_i32 = arith.constant 0 : i32
    %c0_i32_0 = arith.constant 0 : i32
    return %arg0, %c0_i32, %arg1 : i32, i32, i32
  }
  func.func @transform_1(%arg0: i32, %arg1: i32) -> (i32, i32) {
    %c0_i32 = arith.constant 0 : i32
    %c0_i32_0 = arith.constant 0 : i32
    %c0_i32_1 = arith.constant 0 : i32
    return %c0_i32, %c0_i32_0 : i32, i32
  }
  func.func @transform_2(%arg0: i32, %arg1: i32) -> (i32, i32) {
    %c0_i32 = arith.constant 0 : i32
    %c0_i32_0 = arith.constant 0 : i32
    %c0_i32_1 = arith.constant 0 : i32
    return %c0_i32, %c0_i32_0 : i32, i32
  }
  func.func @transform_3(%arg0: i32, %arg1: i32) -> (i32, i32) {
    %c0_i32 = arith.constant 0 : i32
    %c0_i32_0 = arith.constant 0 : i32
    return %arg0, %c0_i32 : i32, i32
  }
}

</mosaic_0001>

<llo_original>
// kernel: tpu_custom_call.1
$region0: #{tpu_custom_call.1}
  #allocation0 [shape = 'u32[]', space=smem, size = 0x4, offset = 0x4, fixed_abs, tag = 'smem constant byte address 0x4 - core index']
  #allocation1 [shape = 'u32[72,128]{1,0:T(1,128)}', space=vmem, size = 0x9000, scoped, tag = 'internal scratch']
  #allocation2 [shape = 'f32[2,4,128]{2,1,0:T(4,128)}', space=vmem, size = 0x1000, scoped, tag = 'scratch operand']
  %s0 = inlined_call_operand.hbm [shape: f32[2,4,256], index: 0, kind: input, shape index: {}]
  %s1 = inlined_call_operand.hbm [shape: f32[4,128], index: 1, kind: input, shape index: {}]
  %s2 = inlined_call_operand.vmem [shape: f32[1,128], index: 2, kind: input, shape index: {}]
  %s3 = inlined_call_operand.hbm [shape: f32[2,128], index: 3, kind: output, shape index: {}]
  %s4 = sld [smem:[#allocation0]]
  $region38: #{tpu_custom_call.1} parent=0
    _
  %s6 = ssub.s32 1, %s4
  %s7 = scalar_select 0, %s6, %s4
  $region1: #{tpu_custom_call.1} parent=0
    #allocation3 [shape = 'u8[8192]{0}', space=vmem, size = 0x2000, scoped, tag = 'input window, operand 0, single buffered']
    #allocation4 [shape = 's32[1]{0}', space=sflag, size = 0x4, scoped, tag = 'scoped memory for tpu_custom_call.1']
    #allocation5 [shape = 's32[1]{0}', space=sflag, size = 0x4, scoped, tag = 'scoped memory for tpu_custom_call.1']
    #allocation6 [shape = 'u8[2048]{0}', space=vmem, size = 0x800, scoped, tag = 'input window, operand 1, single buffered']
    #allocation7 [shape = 's32[1]{0}', space=sflag, size = 0x4, scoped, tag = 'scoped memory for tpu_custom_call.1']
    #allocation8 [shape = 'u8[1024]{0}', space=vmem, size = 0x400, scoped, tag = 'output window, operand 0, single buffered']
    %8 = vsyncpa [#allocation4], 0
    %9 = vsyncpa [#allocation7], 0
    %10 = vsyncpa [#allocation5], 0
    // Predicated region
    $region2: #{tpu_custom_call.1} parent=1 // pred_check
      _
    $region3: #{tpu_custom_call.1} parent=1 // pred_check_branch
      %12 = sbr.rel (0) target = $region5
    $region4: #{tpu_custom_call.1} parent=1 // pred_region
      %14 = vsyncadd [#allocation4], 0
      %s15 = sshll.u32 %s0, 4
      %s16 = int_to_ptr.hbm [resolvable:$true] %s15
      %s17 = sshll.u32 [#allocation3], 4
      %s18 = int_to_ptr.vmem [resolvable:$true] %s17
      %23 = dma.hbm_to_vmem [thread:$0]  %s16, 256, %s18, [#allocation4], 128, 128, 8
    $region5: #{tpu_custom_call.1} parent=1 // pred_fallthru
      _
    // Predicated region
    $region6: #{tpu_custom_call.1} parent=1 // pred_check
      _
    $region7: #{tpu_custom_call.1} parent=1 // pred_check_branch
      %25 = sbr.rel (0) target = $region9
    $region8: #{tpu_custom_call.1} parent=1 // pred_region
      %27 = vsyncadd [#allocation7], 0
      %s29 = sshll.u32 %s1, 4
      %s30 = int_to_ptr.hbm [resolvable:$true] %s29
      %s31 = sshll.u32 [#allocation6], 4
      %s32 = int_to_ptr.vmem [resolvable:$true] %s31
      %34 = dma.hbm_to_vmem [thread:$0]  %s30, 64, %s32, [#allocation7]
    $region9: #{tpu_custom_call.1} parent=1 // pred_fallthru
      _
    // Predicated region
    $region10: #{tpu_custom_call.1} parent=1 // pred_check
      _
    $region11: #{tpu_custom_call.1} parent=1 // pred_check_branch
      %36 = sbr.rel (0) target = $region13
    $region12: #{tpu_custom_call.1} parent=1 // pred_region
      _
    $region13: #{tpu_custom_call.1} parent=1 // pred_fallthru
      _
    // Predicated region
    $region14: #{tpu_custom_call.1} parent=1 // pred_check
      _
    $region15: #{tpu_custom_call.1} parent=1 // pred_check_branch
      %38 = sbr.rel (0) target = $region17
    $region16: #{tpu_custom_call.1} parent=1 // pred_region
      %40 = dma.done [#allocation4], 256
    $region17: #{tpu_custom_call.1} parent=1 // pred_fallthru
      _
    // Predicated region
    $region18: #{tpu_custom_call.1} parent=1 // pred_check
      _
    $region19: #{tpu_custom_call.1} parent=1 // pred_check_branch
      %42 = sbr.rel (0) target = $region21
    $region20: #{tpu_custom_call.1} parent=1 // pred_region
      %44 = dma.done [#allocation7], 64
    $region21: #{tpu_custom_call.1} parent=1 // pred_fallthru
      _
    %p45 = scmp.eq.s32.totalorder 0, 0
    // Predicated region
    $region22: #{tpu_custom_call.1} parent=1 // pred_check
      %p46 = pneg %p45
    $region23: #{tpu_custom_call.1} parent=1 // pred_check_branch
      %48 = sbr.rel (%p46) target = $region25
    $region24: #{tpu_custom_call.1} parent=1 // pred_region
      %49 = vst [vmem:[#allocation2] sm:$0xf] 0.0
      %50 = vst [vmem:[#allocation2 + $0x4] sm:$0xf] 0.0
    $region25: #{tpu_custom_call.1} parent=1 // pred_fallthru
      _
    %v51 = vld [vmem:[#allocation3] sm:$0xff]
    %v52 = vld [vmem:[#allocation3 + $0x8] sm:$0xff]
    %v55 = vrot.slane %v51, 4
    %v56 = vrot.slane %v52, 4
    %v59 = vadd.f32 %v51, %v55
    %v60 = vadd.f32 %v52, %v56
    %v61 = vld [vmem:[#allocation2] sm:$0xf]
    %v62 = vld [vmem:[#allocation2 + $0x4] sm:$0xf]
    %v63 = vadd.f32 %v61, %v59
    %v64 = vadd.f32 %v62, %v60
    %65 = vst [vmem:[#allocation2] sm:$0xf] %v63
    %66 = vst [vmem:[#allocation2 + $0x4] sm:$0xf] %v64
    // Predicated region
    $region26: #{tpu_custom_call.1} parent=1 // pred_check
      %p67 = pneg %p45
    $region27: #{tpu_custom_call.1} parent=1 // pred_check_branch
      %69 = sbr.rel (%p67) target = $region29
    $region28: #{tpu_custom_call.1} parent=1 // pred_region
      %v70 = vld [vmem:[#allocation2] sm:$0xf]
      %v71 = vld [vmem:[#allocation2 + $0x4] sm:$0xf]
      %vm72 = vcmask 1043456
      %v73 = vsel %vm72, %v70, 0.0
      %74 = vadd.xlane.f32.xlu0 %v73
      %v75 = vpop.xlane.xlu0 %74
      %v76 = vsel %vm72, %v71, 0.0
      %77 = vadd.xlane.f32.xlu0 %v76
      %v78 = vpop.xlane.xlu0 %77
      %v79 = vmul.f32 %v75, 0.00390625
      %v80 = vmul.f32 %v78, 0.00390625
      %v81 = vld [vmem:[#allocation6] sm:$0xf]
      %v82 = vld [vmem:[%s2] sm:$0x1]
      %v84 = vperm.slane %v82, 0
      %v88 = vlaneseq
      %v89 = vand.u32 %v88, 127
      %v90 = vperm.slane %v79, %v89
      %v91 = vperm.slane %v80, %v89
      %vm92 = vcmask 1041409
      %v93 = vsel %vm92, %v91, %v90
      %vm94 = vcmask 31744
      %v95 = vsel %vm94, %v93, 0
      %v98 = vsel %vm72, %v81, 0
      %100 = vmatpush.msra.mxu0 0.0
      %101 = vmatpush.msra.mxu0 0.0
      %102 = vmatpush.msra.mxu0 0.0
      %103 = vmatpush.msra.mxu0 0.0
      %104 = vmatpush.msra.mxu0 0.0
      %105 = vmatpush.msra.mxu0 0.0
      %106 = vmatpush.msra.mxu0 0.0
      %107 = vmatpush.msra.mxu0 0.0
      %108 = vmatpush.msra.mxu0 0.0
      %109 = vmatpush.msra.mxu0 0.0
      %110 = vmatpush.msra.mxu0 0.0
      %111 = vmatpush.msra.mxu0 0.0
      %112 = vmatpush.msra.mxu0 0.0
      %113 = vmatpush.msra.mxu0 0.0
      %114 = vmatpush.msra.mxu0 0.0
      %115 = vmatpush.msra.mxu0 %v98
      %116 = vmatmul.f32.gmra.mxu0 %v95
      %v117 = vpop.f32.mrf.mxu0
      %v118 = vadd.f32 %v84, %v117
      %119 = vdwg.mxu0
      %120 = vst [vmem:[#allocation8] sm:$0x3] %v118
    $region29: #{tpu_custom_call.1} parent=1 // pred_fallthru
      _
    // Predicated region
    $region30: #{tpu_custom_call.1} parent=1 // pred_check
      _
    $region31: #{tpu_custom_call.1} parent=1 // pred_check_branch
      %122 = sbr.rel (0) target = $region33
    $region32: #{tpu_custom_call.1} parent=1 // pred_region
      %124 = vsyncadd [#allocation5], 0
      %s126 = sshll.u32 [#allocation8], 4
      %s127 = int_to_ptr.vmem [resolvable:$true] %s126
      %s128 = sshll.u32 %s3, 4
      %s129 = int_to_ptr.hbm [resolvable:$true] %s128
      %131 = dma.vmem_to_hbm [thread:$0]  %s127, 32, %s129, [#allocation5]
    $region33: #{tpu_custom_call.1} parent=1 // pred_fallthru
      _
    // Predicated region
    $region34: #{tpu_custom_call.1} parent=1 // pred_check
      _
    $region35: #{tpu_custom_call.1} parent=1 // pred_check_branch
      %133 = sbr.rel (0) target = $region37
    $region36: #{tpu_custom_call.1} parent=1 // pred_region
      %135 = dma.done [#allocation5], 32
    $region37: #{tpu_custom_call.1} parent=1 // pred_fallthru
      _
    %136 = vsyncpa [#allocation4], 1
    %137 = vsyncpa [#allocation7], 1
    %138 = vsyncpa [#allocation5], 1

</llo_original>
